<compile_context>
chip_gen: v6e
topology: v6e:2x2x1
jax: 0.10.0
libtpu: 0.0.40
codegen_flags: <defaults>
</compile_context>

<pallas_src>
import jax
import jax.numpy as jnp
from jax.experimental import pallas as pl
from jax.experimental.pallas import tpu as pltpu


def _build_rope_tables(seq_len, embed_dim):
    """(S, D) cos/sin tables, rounded through f16 like the PyTorch module."""
    pos = jnp.arange(seq_len, dtype=jnp.float32)[:, None]                  # (S, 1)
    exps = -jnp.arange(0, embed_dim, 2, dtype=jnp.float32) / embed_dim     # (D/2,)
    exps = jnp.repeat(exps, 2, axis=0)                                     # (D,)
    freqs = jnp.power(10000.0, exps)[None, :]                              # (1, D)
    angles = pos * freqs                                                   # (S, D)
    cos = jnp.cos(angles).astype(jnp.float16).astype(jnp.float32)
    sin = jnp.sin(angles).astype(jnp.float16).astype(jnp.float32)
    return cos, sin


def _rope_kernel(cos_ref, sin_a_ref, sin_b_ref, x_ref, o_ref):
    # x_ref: (tile_s, L) with L = H*D; tables: (tile_s, L)
    x = x_ref[...].astype(jnp.float32)
    L = x.shape[-1]
    # x_next[j] = x[(j+1) % L], x_prev[j] = x[(j-1) % L]  (wrap-around lanes are
    # multiplied by exact zeros in the masked sin tables, so circularity is safe)
    x_next = pltpu.roll(x, shift=L - 1, axis=1)
    x_prev = pltpu.roll(x, shift=1, axis=1)
    out = x * cos_ref[...] + x_next * sin_a_ref[...] + x_prev * sin_b_ref[...]
    o_ref[...] = out.astype(o_ref.dtype)


def _pick_tile_s(S, L, x_bytes, out_bytes, budget_bytes=20 * 1024 * 1024):
    # double-buffered x block + out block + 3 f32 table blocks
    per_row = L * 2 * (x_bytes + out_bytes + 3 * 4)
    t = int(budget_bytes // max(per_row, 1))
    if t >= S:
        return S
    t = max(8, (t // 8) * 8)
    return min(t, S)


def rope(x, token_loc=None, *, tile_s=None, vmem_limit_bytes=48 * 1024 * 1024):
    """x: (B, S, H, D). Returns (B, S, H, D) with dtype == x.dtype."""
    assert x.ndim == 4, "expected (batch, seq, heads, embed_dim)"
    B, S, H, D = x.shape
    L = H * D

    cos_sd, sin_sd = _build_rope_tables(S, D)          # (S, D) f32 (f16-rounded)
    if token_loc is not None:
        # TODO(synk): token_loc is only supported as a static Python int
        # (the tensor-indexed variant of the PyTorch module is not implemented).
        cos_sd = jnp.broadcast_to(cos_sd[token_loc][None, :], (S, D))
        sin_sd = jnp.broadcast_to(sin_sd[token_loc][None, :], (S, D))

    # Fold the (-x_odd, x_even) pairing signs into masked sin tables:
    #   even lane j:  out += x[j+1] * (-sin[j])
    #   odd  lane j:  out += x[j-1] * (+sin[j])
    lane_even = (jnp.arange(D) % 2 == 0)[None, :]
    sin_a_sd = jnp.where(lane_even, -sin_sd, 0.0)      # multiplies x_next
    sin_b_sd = jnp.where(lane_even, 0.0, sin_sd)       # multiplies x_prev

    # Tile tables along the flattened head*dim lane axis.
    cos_t = jnp.tile(cos_sd, (1, H))                   # (S, L)
    sin_a_t = jnp.tile(sin_a_sd, (1, H))
    sin_b_t = jnp.tile(sin_b_sd, (1, H))

    x3 = x.reshape(B, S, L)

    if tile_s is None:
        tile_s = _pick_tile_s(S, L, x.dtype.itemsize, x.dtype.itemsize)

    grid = (pl.cdiv(S, tile_s), B)                     # batch innermost -> tables stay resident

    out3 = pl.pallas_call(
        _rope_kernel,
        out_shape=jax.ShapeDtypeStruct((B, S, L), x.dtype),
        grid_spec=pltpu.PrefetchScalarGridSpec(
            num_scalar_prefetch=0,
            grid=grid,
            in_specs=[
                pl.BlockSpec((tile_s, L), lambda s, b: (s, 0)),
                pl.BlockSpec((tile_s, L), lambda s, b: (s, 0)),
                pl.BlockSpec((tile_s, L), lambda s, b: (s, 0)),
                pl.BlockSpec((None, tile_s, L), lambda s, b: (b, s, 0)),
            ],
            out_specs=pl.BlockSpec((None, tile_s, L), lambda s, b: (b, s, 0)),
        ),
        compiler_params=pltpu.CompilerParams(
            dimension_semantics=("parallel", "parallel"),
            vmem_limit_bytes=vmem_limit_bytes,
        ),
    )(cos_t, sin_a_t, sin_b_t, x3)

    return out3.reshape(B, S, H, D)


def rope_ref(x, token_loc=None):
    """Pure-JAX reference matching the PyTorch forward."""
    B, S, H, D = x.shape
    cos_sd, sin_sd = _build_rope_tables(S, D)
    if token_loc is None:
        cos4 = cos_sd[None, :, None, :]
        sin4 = sin_sd[None, :, None, :]
    else:
        cos4 = cos_sd[token_loc][None, None, None, :]
        sin4 = sin_sd[token_loc][None, None, None, :]
    x1 = x * cos4
    x_shifted = jnp.stack([-x[..., 1::2], x[..., 0::2]], axis=-1).reshape(x.shape)
    x2 = x_shifted * sin4
    return x1 + x2


if __name__ == "__main__":
    B, S, H, D = 2, 8, 4, 32   # batch, seq, heads, embed_dim  (lane width H*D = 128)
    key = jax.random.PRNGKey(0)
    x = jax.random.normal(key, (B, S, H, D), dtype=jnp.float32)

    # token_loc=None path
    out = rope(x)
    out = jax.block_until_ready(out)
    ref = rope_ref(x)
    assert out.shape == (B, S, H, D)
    assert out.dtype == x.dtype
    assert jnp.allclose(out, ref, atol=1e-4, rtol=1e-4)

    # token_loc path (single position broadcast over the sequence)
    out_tl = jax.block_until_ready(rope(x, token_loc=3))
    ref_tl = rope_ref(x, token_loc=3)
    assert jnp.allclose(out_tl, ref_tl, atol=1e-4, rtol=1e-4)

    print("KERNEL_OK")
</pallas_src>

<mosaic_0001>
module attributes {stable_mosaic.version = 11 : i64} {
  func.func @_rope_kernel(%arg0: i32, %arg1: i32, %arg2: memref<8x128xf32, #tpu.memory_space<vmem>>, %arg3: memref<8x128xf32, #tpu.memory_space<vmem>>, %arg4: memref<8x128xf32, #tpu.memory_space<vmem>>, %arg5: memref<1x8x128xf32, #tpu.memory_space<vmem>>, %arg6: memref<1x8x128xf32, #tpu.memory_space<vmem>>) attributes {dimension_semantics = [#tpu.dimension_semantics<parallel>, #tpu.dimension_semantics<parallel>], iteration_bounds = array<i64: 1, 2>, scalar_prefetch = 0 : i64, scratch_operands = 0 : i64, tpu.core_type = #tpu.core_type<tc>, window_params = [{transform_indices = @transform_0, window_bounds = array<i64: 8, 128>}, {transform_indices = @transform_1, window_bounds = array<i64: 8, 128>}, {transform_indices = @transform_2, window_bounds = array<i64: 8, 128>}, {transform_indices = @transform_3, window_bounds = array<i64: 1, 8, 128>}, {transform_indices = @transform_4, window_bounds = array<i64: 1, 8, 128>}]} {
    %c0 = arith.constant 0 : index
    %c0_0 = arith.constant 0 : index
    %c0_1 = arith.constant 0 : index
    %0 = vector.load %arg5[%c0, %c0_0, %c0_1] : memref<1x8x128xf32, #tpu.memory_space<vmem>>, vector<1x8x128xf32>
    %1 = vector.shape_cast %0 : vector<1x8x128xf32> to vector<8x128xf32>
    %c127_i32 = arith.constant 127 : i32
    %2 = tpu.dynamic_rotate %1 by %c127_i32 dim 1 : vector<8x128xf32>, i32 -> vector<8x128xf32>
    %c1_i32 = arith.constant 1 : i32
    %3 = tpu.dynamic_rotate %1 by %c1_i32 dim 1 : vector<8x128xf32>, i32 -> vector<8x128xf32>
    %c0_2 = arith.constant 0 : index
    %c0_3 = arith.constant 0 : index
    %4 = vector.load %arg2[%c0_2, %c0_3] : memref<8x128xf32, #tpu.memory_space<vmem>>, vector<8x128xf32>
    %5 = arith.mulf %1, %4 : vector<8x128xf32>
    %c0_4 = arith.constant 0 : index
    %c0_5 = arith.constant 0 : index
    %6 = vector.load %arg3[%c0_4, %c0_5] : memref<8x128xf32, #tpu.memory_space<vmem>>, vector<8x128xf32>
    %7 = arith.mulf %2, %6 : vector<8x128xf32>
    %8 = arith.addf %5, %7 : vector<8x128xf32>
    %c0_6 = arith.constant 0 : index
    %c0_7 = arith.constant 0 : index
    %9 = vector.load %arg4[%c0_6, %c0_7] : memref<8x128xf32, #tpu.memory_space<vmem>>, vector<8x128xf32>
    %10 = arith.mulf %3, %9 : vector<8x128xf32>
    %11 = arith.addf %8, %10 : vector<8x128xf32>
    %c0_8 = arith.constant 0 : index
    %c0_9 = arith.constant 0 : index
    %c0_10 = arith.constant 0 : index
    %12 = vector.load %arg6[%c0_8, %c0_9, %c0_10] : memref<1x8x128xf32, #tpu.memory_space<vmem>>, vector<1x8x128xf32>
    %13 = vector.shape_cast %12 : vector<1x8x128xf32> to vector<8x128xf32>
    %14 = vector.shape_cast %11 : vector<8x128xf32> to vector<1x8x128xf32>
    tpu.vector_store %arg6[%c0_8, %c0_9, %c0_10], %14 {strides = array<i32>} : memref<1x8x128xf32, #tpu.memory_space<vmem>>, vector<1x8x128xf32>,
    return
  }
  func.func @transform_0(%arg0: i32, %arg1: i32) -> (i32, i32) {
    %c0_i32 = arith.constant 0 : i32
    %c0_i32_0 = arith.constant 0 : i32
    return %arg0, %c0_i32 : i32, i32
  }
  func.func @transform_1(%arg0: i32, %arg1: i32) -> (i32, i32) {
    %c0_i32 = arith.constant 0 : i32
    %c0_i32_0 = arith.constant 0 : i32
    return %arg0, %c0_i32 : i32, i32
  }
  func.func @transform_2(%arg0: i32, %arg1: i32) -> (i32, i32) {
    %c0_i32 = arith.constant 0 : i32
    %c0_i32_0 = arith.constant 0 : i32
    return %arg0, %c0_i32 : i32, i32
  }
  func.func @transform_3(%arg0: i32, %arg1: i32) -> (i32, i32, i32) {
    %c0_i32 = arith.constant 0 : i32
    %c0_i32_0 = arith.constant 0 : i32
    return %arg1, %arg0, %c0_i32 : i32, i32, i32
  }
  func.func @transform_4(%arg0: i32, %arg1: i32) -> (i32, i32, i32) {
    %c0_i32 = arith.constant 0 : i32
    %c0_i32_0 = arith.constant 0 : i32
    return %arg1, %arg0, %c0_i32 : i32, i32, i32
  }
}

</mosaic_0001>

<llo_original>
// kernel: tpu_custom_call.1
$region0: #{tpu_custom_call.1}
  #allocation0 [shape = 'u32[]', space=smem, size = 0x4, offset = 0x4, fixed_abs, tag = 'smem constant byte address 0x4 - core index']
  #allocation1 [shape = 'u32[144,128]{1,0:T(1,128)}', space=vmem, size = 0x12000, scoped, tag = 'internal scratch']
  %s0 = inlined_call_operand.hbm [shape: f32[8,128], index: 0, kind: input, shape index: {}]
  %s1 = inlined_call_operand.hbm [shape: f32[8,128], index: 1, kind: input, shape index: {}]
  %s2 = inlined_call_operand.hbm [shape: f32[8,128], index: 2, kind: input, shape index: {}]
  %s3 = inlined_call_operand.hbm [shape: f32[2,8,128], index: 3, kind: input, shape index: {}]
  %s4 = inlined_call_operand.hbm [shape: f32[2,8,128], index: 4, kind: output, shape index: {}]
  %s5 = sld [smem:[#allocation0]]
  $region65: #{tpu_custom_call.1} parent=0
    _
  %s7 = ssub.s32 1, %s5
  %s8 = scalar_select 0, %s7, %s5
  $region1: #{tpu_custom_call.1} parent=0
    #allocation2 [shape = 'u8[4096]{0}', space=vmem, size = 0x1000, scoped, tag = 'input window, operand 0, single buffered']
    #allocation3 [shape = 's32[2]{0}', space=sflag, size = 0x8, scoped, tag = 'scoped memory for tpu_custom_call.1']
    #allocation4 [shape = 's32[2]{0}', space=sflag, size = 0x8, scoped, tag = 'scoped memory for tpu_custom_call.1']
    #allocation5 [shape = 'u8[4096]{0}', space=vmem, size = 0x1000, scoped, tag = 'input window, operand 1, single buffered']
    #allocation6 [shape = 's32[1]{0}', space=sflag, size = 0x4, scoped, tag = 'scoped memory for tpu_custom_call.1']
    #allocation7 [shape = 'u8[4096]{0}', space=vmem, size = 0x1000, scoped, tag = 'input window, operand 2, single buffered']
    #allocation8 [shape = 'u8[8192]{0}', space=vmem, size = 0x2000, scoped, tag = 'input window, operand 3']
    #allocation9 [shape = 's32[2]{0}', space=sflag, size = 0x8, scoped, tag = 'scoped memory for tpu_custom_call.1']
    #allocation10 [shape = 'u8[8192]{0}', space=vmem, size = 0x2000, scoped, tag = 'output window, operand 0']
    %9 = vsyncpa [#allocation3], 0
    %10 = vsyncpa [#allocation6], 0
    %11 = vsyncpa [#allocation9], 0
    %s12 = scalar_lea.sflag [#allocation9], 1
    %13 = vsyncpa %s12, 0
    %14 = vsyncpa [#allocation4], 0
    %s15 = scalar_lea.sflag [#allocation4], 1
    %16 = vsyncpa %s15, 0
    loop: start=0, step=1, limit=4
    $region2: #{tpu_custom_call.1} parent=1 // loop_pre_header
      _
    $region3: #{tpu_custom_call.1} parent=1 // loop_header
      %s18 = sphi 0, %s22
      %p19 = scmp.ge.s32.totalorder %s18, 4
      %s25 = sphi 0, %s37
      %s26 = sphi 0, %s33
      %s27 = sphi 0, %s25
      %s28 = sphi 0, %s26
      %s29 = sphi 0, %s27
      %s30 = sphi 0, %s28
      %s40 = sphi 0, %s42
      %s43 = sphi 0, %s40
      %s44 = sphi 0, %s43
      %s60 = sphi 0, %s44
      %s66 = sphi 0, %s68
      %s69 = sphi 0, %s66
      %s70 = sphi 0, %s69
      %s86 = sphi 0, %s70
      %s92 = sphi 0, %s94
      %s95 = sphi 0, %s92
      %s96 = sphi 0, %s95
      %s112 = sphi 0, %s96
      %s120 = sphi 0, %s122
      %s123 = sphi 0, %s120
      %s124 = sphi 0, %s123
      %s140 = sphi 0, %s124
      %s148 = sphi 0, %s150
      %s151 = sphi 0, %s148
      %s152 = sphi 0, %s151
      %s168 = sphi 0, %s152
    $region4: #{tpu_custom_call.1} parent=1 // loop_header_branch
      %21 = sbr.rel (%p19) target = $region8
    $region5: #{tpu_custom_call.1} parent=1 // loop_body
      %s23 = ssub.s32 %s18, 1
      %s24 = ssub.s32 %s18, 2
      %s31 = sadd.s32 1, %s26
      %p32 = scmp.ge.s32.totalorder %s31, 2
      %s33 = scalar_select %p32, 0, %s31
      %s34 = sadd.s32 1, %s25
      %s35 = scalar_select %p32, %s34, %s25
      %p36 = scmp.ge.s32.totalorder %s35, 1
      %s37 = scalar_select %p36, 0, %s35
      %s38 = ssub.s32 %s25, %s37
      %p39 = scmp.eq.s32.totalorder %s38, 0
      %s41 = sadd.s32 %s40, 1
      %s42 = scalar_select %p39, %s40, %s41
      %p45 = pneg %p39
      %p46 = scmp.eq.s32.totalorder %s18, 1
      %p47 = por %p45, %p46
      %p48 = scmp.ne.s32.totalorder %s40, %s43
      %p49 = scmp.eq.s32.totalorder %s18, 0
      %p50 = por %p48, %p49
      %p51 = scmp.ne.s32.totalorder %s40, %s43
      %p52 = scmp.eq.s32.totalorder %s23, 1
      %p53 = por %p51, %p52
      %p54 = scmp.ne.s32.totalorder %s43, %s44
      %p55 = scmp.eq.s32.totalorder %s23, 0
      %p56 = por %p54, %p55
      %p57 = scmp.ne.s32.totalorder %s43, %s44
      %p58 = scmp.eq.s32.totalorder %s24, 1
      %p59 = por %p57, %p58
      %p61 = scmp.ne.s32.totalorder %s44, %s60
      %p62 = scmp.eq.s32.totalorder %s24, 0
      %p63 = por %p61, %p62
      %s64 = ssub.s32 %s25, %s37
      %p65 = scmp.eq.s32.totalorder %s64, 0
      %s67 = sadd.s32 %s66, 1
      %s68 = scalar_select %p65, %s66, %s67
      %p71 = pneg %p65
      %p72 = scmp.eq.s32.totalorder %s18, 1
      %p73 = por %p71, %p72
      %p74 = scmp.ne.s32.totalorder %s66, %s69
      %p75 = scmp.eq.s32.totalorder %s18, 0
      %p76 = por %p74, %p75
      %p77 = scmp.ne.s32.totalorder %s66, %s69
      %p78 = scmp.eq.s32.totalorder %s23, 1
      %p79 = por %p77, %p78
      %p80 = scmp.ne.s32.totalorder %s69, %s70
      %p81 = scmp.eq.s32.totalorder %s23, 0
      %p82 = por %p80, %p81
      %p83 = scmp.ne.s32.totalorder %s69, %s70
      %p84 = scmp.eq.s32.totalorder %s24, 1
      %p85 = por %p83, %p84
      %p87 = scmp.ne.s32.totalorder %s70, %s86
      %p88 = scmp.eq.s32.totalorder %s24, 0
      %p89 = por %p87, %p88
      %s90 = ssub.s32 %s25, %s37
      %p91 = scmp.eq.s32.totalorder %s90, 0
      %s93 = sadd.s32 %s92, 1
      %s94 = scalar_select %p91, %s92, %s93
      %p97 = pneg %p91
      %p98 = scmp.eq.s32.totalorder %s18, 1
      %p99 = por %p97, %p98
      %p100 = scmp.ne.s32.totalorder %s92, %s95
      %p101 = scmp.eq.s32.totalorder %s18, 0
      %p102 = por %p100, %p101
      %p103 = scmp.ne.s32.totalorder %s92, %s95
      %p104 = scmp.eq.s32.totalorder %s23, 1
      %p105 = por %p103, %p104
      %p106 = scmp.ne.s32.totalorder %s95, %s96
      %p107 = scmp.eq.s32.totalorder %s23, 0
      %p108 = por %p106, %p107
      %p109 = scmp.ne.s32.totalorder %s95, %s96
      %p110 = scmp.eq.s32.totalorder %s24, 1
      %p111 = por %p109, %p110
      %p113 = scmp.ne.s32.totalorder %s96, %s112
      %p114 = scmp.eq.s32.totalorder %s24, 0
      %p115 = por %p113, %p114
      %s116 = ssub.s32 %s26, %s33
      %s117 = ssub.s32 %s25, %s37
      %s118 = sor.u32 %s116, %s117
      %p119 = scmp.eq.s32.totalorder %s118, 0
      %s121 = sadd.s32 %s120, 1
      %s122 = scalar_select %p119, %s120, %s121
      %p125 = pneg %p119
      %p126 = scmp.eq.s32.totalorder %s18, 1
      %p127 = por %p125, %p126
      %p128 = scmp.ne.s32.totalorder %s120, %s123
      %p129 = scmp.eq.s32.totalorder %s18, 0
      %p130 = por %p128, %p129
      %p131 = scmp.ne.s32.totalorder %s120, %s123
      %p132 = scmp.eq.s32.totalorder %s23, 1
      %p133 = por %p131, %p132
      %p134 = scmp.ne.s32.totalorder %s123, %s124
      %p135 = scmp.eq.s32.totalorder %s23, 0
      %p136 = por %p134, %p135
      %p137 = scmp.ne.s32.totalorder %s123, %s124
      %p138 = scmp.eq.s32.totalorder %s24, 1
      %p139 = por %p137, %p138
      %p141 = scmp.ne.s32.totalorder %s124, %s140
      %p142 = scmp.eq.s32.totalorder %s24, 0
      %p143 = por %p141, %p142
      %s144 = ssub.s32 %s26, %s33
      %s145 = ssub.s32 %s25, %s37
      %s146 = sor.u32 %s144, %s145
      %p147 = scmp.eq.s32.totalorder %s146, 0
      %s149 = sadd.s32 %s148, 1
      %s150 = scalar_select %p147, %s148, %s149
      %p153 = pneg %p147
      %p154 = scmp.eq.s32.totalorder %s18, 1
      %p155 = por %p153, %p154
      %p156 = scmp.ne.s32.totalorder %s148, %s151
      %p157 = scmp.eq.s32.totalorder %s18, 0
      %p158 = por %p156, %p157
      %p159 = scmp.ne.s32.totalorder %s148, %s151
      %p160 = scmp.eq.s32.totalorder %s23, 1
      %p161 = por %p159, %p160
      %p162 = scmp.ne.s32.totalorder %s151, %s152
      %p163 = scmp.eq.s32.totalorder %s23, 0
      %p164 = por %p162, %p163
      %p165 = scmp.ne.s32.totalorder %s151, %s152
      %p166 = scmp.eq.s32.totalorder %s24, 1
      %p167 = por %p165, %p166
      %p169 = scmp.ne.s32.totalorder %s152, %s168
      %p170 = scmp.eq.s32.totalorder %s24, 0
      %p171 = por %p169, %p170
      %p172 = scmp.le.s32.totalorder 1, %s18
      %p173 = scmp.lt.s32.totalorder %s18, 3
      %p174 = pnand %p172, %p173
      %p175 = pneg %p174
      // Predicated region
      $region9: #{tpu_custom_call.1} parent=5 // pred_check
        _
      $region10: #{tpu_custom_call.1} parent=5 // pred_check_branch
        %177 = sbr.rel (%p174) target = $region12
      $region11: #{tpu_custom_call.1} parent=5 // pred_region
        %s178 = ssub.s32 %s18, 1
        // Predicated region
        $region13: #{tpu_custom_call.1} parent=11 // pred_check
          %p179 = pneg %p56
        $region14: #{tpu_custom_call.1} parent=11 // pred_check_branch
          %181 = sbr.rel (%p179) target = $region16
        $region15: #{tpu_custom_call.1} parent=11 // pred_region
          %s183 = ssub.s32 128, 128
          %184 = vsyncadd [#allocation3], %s183
          %s185 = smul.addr %s27, 128
          %s186 = scalar_lea.hbm %s0, %s185
          %s188 = sshll.u32 [#allocation2], 4
          %s189 = int_to_ptr.vmem [resolvable:$true] %s188
          %191 = dma.hbm_to_vmem [thread:$0]  %s186, 128, %s189, [#allocation3]
        $region16: #{tpu_custom_call.1} parent=11 // pred_fallthru
          _
        // Predicated region
        $region17: #{tpu_custom_call.1} parent=11 // pred_check
          %p192 = pneg %p82
        $region18: #{tpu_custom_call.1} parent=11 // pred_check_branch
          %194 = sbr.rel (%p192) target = $region20
        $region19: #{tpu_custom_call.1} parent=11 // pred_region
          %s196 = ssub.s32 128, 128
          %197 = vsyncadd [#allocation6], %s196
          %s198 = smul.addr %s27, 128
          %s199 = scalar_lea.hbm %s1, %s198
          %s201 = sshll.u32 [#allocation5], 4
          %s202 = int_to_ptr.vmem [resolvable:$true] %s201
          %204 = dma.hbm_to_vmem [thread:$0]  %s199, 128, %s202, [#allocation6]
        $region20: #{tpu_custom_call.1} parent=11 // pred_fallthru
          _
        // Predicated region
        $region21: #{tpu_custom_call.1} parent=11 // pred_check
          %p205 = pneg %p108
        $region22: #{tpu_custom_call.1} parent=11 // pred_check_branch
          %207 = sbr.rel (%p205) target = $region24
        $region23: #{tpu_custom_call.1} parent=11 // pred_region
          %s209 = ssub.s32 128, 128
          %210 = vsyncadd [#allocation6], %s209
          %s211 = smul.addr %s27, 128
          %s212 = scalar_lea.hbm %s2, %s211
          %s214 = sshll.u32 [#allocation7], 4
          %s215 = int_to_ptr.vmem [resolvable:$true] %s214
          %217 = dma.hbm_to_vmem [thread:$0]  %s212, 128, %s215, [#allocation6]
        $region24: #{tpu_custom_call.1} parent=11 // pred_fallthru
          _
      $region12: #{tpu_custom_call.1} parent=5 // pred_fallthru
        _
      %p218 = scmp.lt.s32.totalorder %s18, 2
      // Predicated region
      $region25: #{tpu_custom_call.1} parent=5 // pred_check
        %p219 = pneg %p218
      $region26: #{tpu_custom_call.1} parent=5 // pred_check_branch
        %221 = sbr.rel (%p219) target = $region28
      $region27: #{tpu_custom_call.1} parent=5 // pred_region
        // Predicated region
        $region29: #{tpu_custom_call.1} parent=27 // pred_check
          %p222 = pneg %p130
        $region30: #{tpu_custom_call.1} parent=27 // pred_check_branch
          %224 = sbr.rel (%p222) target = $region32
        $region31: #{tpu_custom_call.1} parent=27 // pred_region
          %s225 = sand.u32 %s120, 1
          %s226 = scalar_lea.sflag [#allocation9], %s225
          %s227 = sand.u32 %s120, 1
          %s228 = smul.addr %s227, 8
          %s229 = scalar_lea.vmem [#allocation8], %s228
          %s231 = ssub.s32 128, 128
          %232 = vsyncadd %s226, %s231
          %s233 = sadd.s32 %s25, %s26
          %s234 = smul.addr %s233, 128
          %s235 = scalar_lea.hbm %s3, %s234
          %s237 = sshll.u32 %s229, 4
          %s238 = int_to_ptr.vmem [resolvable:$true] %s237
          %240 = dma.hbm_to_vmem [thread:$0]  %s235, 128, %s238, %s226
        $region32: #{tpu_custom_call.1} parent=27 // pred_fallthru
          _
      $region28: #{tpu_custom_call.1} parent=5 // pred_fallthru
        _
      %p241 = scmp.le.s32.totalorder 1, %s18
      %p242 = scmp.lt.s32.totalorder %s18, 3
      %p243 = pnand %p241, %p242
      %p244 = pneg %p243
      // Predicated region
      $region33: #{tpu_custom_call.1} parent=5 // pred_check
        _
      $region34: #{tpu_custom_call.1} parent=5 // pred_check_branch
        %246 = sbr.rel (%p243) target = $region36
      $region35: #{tpu_custom_call.1} parent=5 // pred_region
        %s247 = ssub.s32 %s18, 1
        // Predicated region
        $region37: #{tpu_custom_call.1} parent=35 // pred_check
          %p248 = pneg %p56
        $region38: #{tpu_custom_call.1} parent=35 // pred_check_branch
          %250 = sbr.rel (%p248) target = $region40
        $region39: #{tpu_custom_call.1} parent=35 // pred_region
          %251 = dma.done [#allocation3], 128
        $region40: #{tpu_custom_call.1} parent=35 // pred_fallthru
          _
        // Predicated region
        $region41: #{tpu_custom_call.1} parent=35 // pred_check
          %p252 = pneg %p82
        $region42: #{tpu_custom_call.1} parent=35 // pred_check_branch
          %254 = sbr.rel (%p252) target = $region44
        $region43: #{tpu_custom_call.1} parent=35 // pred_region
          %255 = dma.done [#allocation6], 128
        $region44: #{tpu_custom_call.1} parent=35 // pred_fallthru
          _
        // Predicated region
        $region45: #{tpu_custom_call.1} parent=35 // pred_check
          %p256 = pneg %p108
        $region46: #{tpu_custom_call.1} parent=35 // pred_check_branch
          %258 = sbr.rel (%p256) target = $region48
        $region47: #{tpu_custom_call.1} parent=35 // pred_region
          %259 = dma.done [#allocation6], 128
        $region48: #{tpu_custom_call.1} parent=35 // pred_fallthru
          _
        %s260 = sand.u32 %s123, 1
        %s261 = scalar_lea.sflag [#allocation9], %s260
        %s262 = sand.u32 %s123, 1
        %s263 = smul.addr %s262, 8
        %s264 = scalar_lea.vmem [#allocation8], %s263
        // Predicated region
        $region49: #{tpu_custom_call.1} parent=35 // pred_check
          %p265 = pneg %p136
        $region50: #{tpu_custom_call.1} parent=35 // pred_check_branch
          %267 = sbr.rel (%p265) target = $region52
        $region51: #{tpu_custom_call.1} parent=35 // pred_region
          %268 = dma.done %s261, 128
        $region52: #{tpu_custom_call.1} parent=35 // pred_fallthru
          _
        %p269 = pneg %p56
        %p270 = pneg %p53
        %p271 = pneg %p82
        %p272 = pneg %p79
        %p273 = pneg %p108
        %p274 = pneg %p105
        %s275 = sand.u32 %s123, 1
        %s276 = scalar_lea.sflag [#allocation9], %s275
        %s277 = sand.u32 %s123, 1
        %s278 = smul.addr %s277, 8
        %s279 = scalar_lea.vmem [#allocation8], %s278
        %p280 = pneg %p136
        %p281 = pneg %p133
        %p282 = pneg %p164
        %p283 = pneg %p161
        %s284 = sand.u32 %s151, 1
        %s285 = scalar_lea.sflag [#allocation4], %s284
        %s286 = sand.u32 %s151, 1
        %s287 = smul.addr %s286, 8
        %s288 = scalar_lea.vmem [#allocation10], %s287
        %v289 = vld [vmem:[%s264] sm:$0xff]
        %290 = vrot.lane.b32.xlu0 %v289, 127
        %v291 = vpop.permute.xlu0 %290
        %292 = vrot.lane.b32.xlu0 %v289, 1
        %v293 = vpop.permute.xlu0 %292
        %v294 = vld [vmem:[#allocation2] sm:$0xff]
        %v295 = vmul.f32 %v289, %v294
        %v296 = vld [vmem:[#allocation5] sm:$0xff]
        %v297 = vmul.f32 %v291, %v296
        %v298 = vadd.f32 %v295, %v297
        %v299 = vld [vmem:[#allocation7] sm:$0xff]
        %v300 = vmul.f32 %v293, %v299
        %v301 = vadd.f32 %v298, %v300
        %302 = vst [vmem:[%s288] sm:$0xff] %v301
        %s303 = sand.u32 %s151, 1
        %s304 = scalar_lea.sflag [#allocation4], %s303
        %s305 = sand.u32 %s151, 1
        %s306 = smul.addr %s305, 8
        %s307 = scalar_lea.vmem [#allocation10], %s306
        // Predicated region
        $region53: #{tpu_custom_call.1} parent=35 // pred_check
          %p308 = pneg %p161
        $region54: #{tpu_custom_call.1} parent=35 // pred_check_branch
          %310 = sbr.rel (%p308) target = $region56
        $region55: #{tpu_custom_call.1} parent=35 // pred_region
          %s312 = ssub.s32 128, 128
          %313 = vsyncadd %s304, %s312
          %s314 = sadd.s32 %s27, %s28
          %s315 = smul.addr %s314, 128
          %s316 = scalar_lea.hbm %s4, %s315
          %s318 = sshll.u32 %s307, 4
          %s319 = int_to_ptr.vmem [resolvable:$true] %s318
          %321 = dma.vmem_to_hbm [thread:$0]  %s319, 128, %s316, %s304
        $region56: #{tpu_custom_call.1} parent=35 // pred_fallthru
          _
      $region36: #{tpu_custom_call.1} parent=5 // pred_fallthru
        _
      %p322 = scmp.le.s32.totalorder 2, %s18
      // Predicated region
      $region57: #{tpu_custom_call.1} parent=5 // pred_check
        %p323 = pneg %p322
      $region58: #{tpu_custom_call.1} parent=5 // pred_check_branch
        %325 = sbr.rel (%p323) target = $region60
      $region59: #{tpu_custom_call.1} parent=5 // pred_region
        %s326 = ssub.s32 %s18, 2
        // Predicated region
        $region61: #{tpu_custom_call.1} parent=59 // pred_check
          %p327 = pneg %p167
        $region62: #{tpu_custom_call.1} parent=59 // pred_check_branch
          %329 = sbr.rel (%p327) target = $region64
        $region63: #{tpu_custom_call.1} parent=59 // pred_region
          %s330 = sand.u32 %s152, 1
          %s331 = scalar_lea.sflag [#allocation4], %s330
          %s332 = sand.u32 %s152, 1
          %s333 = smul.addr %s332, 8
          %s334 = scalar_lea.vmem [#allocation10], %s333
          %335 = dma.done %s331, 128
        $region64: #{tpu_custom_call.1} parent=59 // pred_fallthru
          _
      $region60: #{tpu_custom_call.1} parent=5 // pred_fallthru
        _
    $region6: #{tpu_custom_call.1} parent=1 // loop_footer
      %s22 = sadd.s32 1, %s18
    $region7: #{tpu_custom_call.1} parent=1 // loop_footer_branch
      %17 = sbr.rel target = $region3
    $region8: #{tpu_custom_call.1} parent=1 // loop_exit
      _
    %336 = vsyncpa [#allocation3], 1
    %s337 = scalar_lea.sflag [#allocation3], 1
    %338 = vsyncpa %s337, 1
    %339 = vsyncpa [#allocation6], 1
    %340 = vsyncpa [#allocation9], 1
    %s341 = scalar_lea.sflag [#allocation9], 1
    %342 = vsyncpa %s341, 1
    %343 = vsyncpa [#allocation4], 1
    %s344 = scalar_lea.sflag [#allocation4], 1
    %345 = vsyncpa %s344, 1

</llo_original>
